<compile_context>
chip_gen: v6e
topology: v6e:2x2x1
jax: 0.10.0
libtpu: 0.0.40
codegen_flags: <defaults>
</compile_context>

<pallas_src>
import functools

import jax
import jax.numpy as jnp
from jax.experimental import pallas as pl
from jax.experimental.pallas import tpu as pltpu

INPUTSIZE = 9
HIDDEN1 = 100
HIDDEN2 = 50
OUTPUTSIZE = 1

# Tile ceiling that fits every generation's default scoped VMEM (v5e is the
# binding one at 16 MiB): ~7 MB of VMEM at 8192 columns.
_MAX_TILE_B = 8192
# Below this batch size the plain-JAX path beats kernel launch + pad overhead.
_SMALL_BATCH_THRESHOLD = 512


def _round_up(n, m):
    return ((n + m - 1) // m) * m


def mlp_kernel(xa_ref, w1a_ref, w2a_ref, w3a_ref, o_ref):
    # Layer 1 (MXU): [H1+1, IN+1] @ [IN+1, TILE_B] -> [H1+1, TILE_B].
    # b1 is folded in via the ones row of xa; row H1 of w1a is all-zero except
    # a trailing 1, so h1's last row is relu(1) = 1 (carries layer-2's bias).
    h1 = jnp.maximum(
        jnp.dot(w1a_ref[...], xa_ref[...], preferred_element_type=jnp.float32),
        0.0)
    # Layer 2 (MXU): [H2+1, H1+1] @ [H1+1, TILE_B] -> [H2+1, TILE_B].
    # b2 folded in against h1's ones row; h2's last row is again 1.
    h2 = jnp.maximum(
        jnp.dot(w2a_ref[...], h1, preferred_element_type=jnp.float32),
        0.0)
    # Layer 3 (VPU + XLU): 51 -> 1 as broadcast-multiply + sublane reduce.
    # b3 rides as the last row of w3a against h2's ones row.  The result stays
    # lane-dense as [1, TILE_B] (batch on the lane axis -> unmasked stores).
    o_ref[...] = jnp.sum(h2 * w3a_ref[...], axis=0, keepdims=True).astype(o_ref.dtype)


def _prepare_params(params):
    """Fold biases into augmented weight matrices (PyTorch [out, in] layout)."""
    w1, b1, w2, b2, w3, b3 = params
    # W1a: [H1+1, IN+1] = [[w1 | b1], [0...0 | 1]]
    w1a = jnp.zeros((HIDDEN1 + 1, INPUTSIZE + 1), jnp.float32)
    w1a = w1a.at[:HIDDEN1, :INPUTSIZE].set(w1)
    w1a = w1a.at[:HIDDEN1, INPUTSIZE].set(b1)
    w1a = w1a.at[HIDDEN1, INPUTSIZE].set(1.0)
    # W2a: [H2+1, H1+1] = [[w2 | b2], [0...0 | 1]]
    w2a = jnp.zeros((HIDDEN2 + 1, HIDDEN1 + 1), jnp.float32)
    w2a = w2a.at[:HIDDEN2, :HIDDEN1].set(w2)
    w2a = w2a.at[:HIDDEN2, HIDDEN1].set(b2)
    w2a = w2a.at[HIDDEN2, HIDDEN1].set(1.0)
    # w3a: [H2+1, 1] = [w3^T ; b3]
    w3a = jnp.concatenate([w3.reshape(HIDDEN2, 1), b3.reshape(1, 1)], axis=0)
    return w1a, w2a, w3a


def _choose_tile(batch, desired):
    """Pick a lane-tile size: big (amortize grid-step overhead), but
    * capped so it fits default scoped VMEM on every generation, and
    * small enough that the grid has >= 2 steps when there is >= 2 tiles of
      work (so v7x's two TensorCores both get a slice)."""
    batch_p128 = _round_up(max(batch, 1), 128)
    if batch_p128 >= 256:
        tile = min(desired, _round_up((batch_p128 + 1) // 2, 128))
    else:
        tile = batch_p128
    return max(128, min(tile, _MAX_TILE_B))


@functools.partial(jax.jit, static_argnames=("tile_b",))
def mlp_forward_pallas(x, params, tile_b=_MAX_TILE_B):
    """Pallas path (batch-on-lane). x: [batch, INPUTSIZE] float32."""
    batch = x.shape[0]
    w1a, w2a, w3a = _prepare_params(params)

    tile = _choose_tile(batch, tile_b)
    batch_p = _round_up(_round_up(batch, 128), tile)
    grid = (batch_p // tile,)

    # Batch-on-lane layout with the bias-folding ones row appended:
    # xa = [x^T ; 1...1], shape [INPUTSIZE+1, batch_p].  Single pad op (no
    # zero-init + dynamic-update-slice); pad value 1.0 supplies the ones row,
    # padded batch columns are garbage and sliced off below.
    xa = jnp.pad(x.T.astype(jnp.float32),
                 ((0, 1), (0, batch_p - batch)),
                 constant_values=1.0)

    const = lambda i: (0, 0)  # weights stay VMEM-resident across grid steps
    outT = pl.pallas_call(
        mlp_kernel,
        out_shape=jax.ShapeDtypeStruct((1, batch_p), jnp.float32),
        grid=grid,
        in_specs=[
            pl.BlockSpec((INPUTSIZE + 1, tile), lambda i: (0, i)),
            pl.BlockSpec((HIDDEN1 + 1, INPUTSIZE + 1), const),
            pl.BlockSpec((HIDDEN2 + 1, HIDDEN1 + 1), const),
            pl.BlockSpec((HIDDEN2 + 1, 1), const),
        ],
        out_specs=pl.BlockSpec((1, tile), lambda i: (0, i)),
        compiler_params=pltpu.CompilerParams(
            dimension_semantics=("parallel",)),
    )(xa, w1a, w2a, w3a)

    return outT[0, :batch].reshape(batch, OUTPUTSIZE)


def mlp_forward(x, params, tile_b=_MAX_TILE_B):
    """Public entry: small batches use plain JAX, larger ones the Pallas kernel."""
    if x.shape[0] <= _SMALL_BATCH_THRESHOLD:
        return mlp_reference(x, params)
    return mlp_forward_pallas(x, params, tile_b=tile_b)


def mlp_reference(x, params):
    """Plain-JAX reference (exact PyTorch forward semantics)."""
    w1, b1, w2, b2, w3, b3 = params
    h = jnp.maximum(x @ w1.T + b1, 0.0)
    h = jnp.maximum(h @ w2.T + b2, 0.0)
    return h @ w3.T + b3


def init_params(key):
    """Deterministic PyTorch-style (uniform +/- 1/sqrt(fan_in)) init, [out, in] layout."""
    def linear(key, fan_in, fan_out):
        kw, kb = jax.random.split(key)
        bound = 1.0 / jnp.sqrt(fan_in)
        w = jax.random.uniform(kw, (fan_out, fan_in), jnp.float32, -bound, bound)
        b = jax.random.uniform(kb, (fan_out,), jnp.float32, -bound, bound)
        return w, b

    k1, k2, k3 = jax.random.split(key, 3)
    w1, b1 = linear(k1, INPUTSIZE, HIDDEN1)
    w2, b2 = linear(k2, HIDDEN1, HIDDEN2)
    w3, b3 = linear(k3, HIDDEN2, OUTPUTSIZE)
    return (w1, b1, w2, b2, w3, b3)


if __name__ == "__main__":
    key = jax.random.PRNGKey(0)
    k_params, k_x1, k_x2 = jax.random.split(key, 3)
    params = init_params(k_params)

    # Small-shape smoke test: call the Pallas path directly (tiny batches would
    # otherwise dispatch to the plain-JAX fallback).
    x_small = jax.random.normal(k_x1, (8, INPUTSIZE), jnp.float32)
    out_small = mlp_forward_pallas(x_small, params)
    jax.block_until_ready(out_small)
    ref_small = mlp_reference(x_small, params)
    assert out_small.shape == (8, OUTPUTSIZE)
    assert jnp.allclose(out_small, ref_small, atol=1e-4, rtol=1e-4)

    # Medium batch (not a multiple of 128) exercising padding and a multi-step grid.
    x_med = jax.random.normal(k_x2, (2000, INPUTSIZE), jnp.float32)
    out_med = mlp_forward(x_med, params)
    jax.block_until_ready(out_med)
    ref_med = mlp_reference(x_med, params)
    assert out_med.shape == (2000, OUTPUTSIZE)
    assert jnp.allclose(out_med, ref_med, atol=1e-4, rtol=1e-4)

    print("KERNEL_OK")
</pallas_src>

<mosaic_0001>
module attributes {stable_mosaic.version = 11 : i64} {
  func.func @mlp_kernel(%arg0: i32, %arg1: memref<10x128xf32, #tpu.memory_space<vmem>>, %arg2: memref<101x10xf32, #tpu.memory_space<vmem>>, %arg3: memref<51x101xf32, #tpu.memory_space<vmem>>, %arg4: memref<51x1xf32, #tpu.memory_space<vmem>>, %arg5: memref<1x128xf32, #tpu.memory_space<vmem>>) attributes {dimension_semantics = [#tpu.dimension_semantics<parallel>], iteration_bounds = array<i64: 1>, scalar_prefetch = 0 : i64, scratch_operands = 0 : i64, tpu.core_type = #tpu.core_type<tc>, window_params = [{transform_indices = @transform_0, window_bounds = array<i64: 10, 128>}, {pipeline_mode = #tpu.pipeline_mode<synchronous>, transform_indices = @transform_1, window_bounds = array<i64: 101, 10>}, {pipeline_mode = #tpu.pipeline_mode<synchronous>, transform_indices = @transform_2, window_bounds = array<i64: 51, 101>}, {pipeline_mode = #tpu.pipeline_mode<synchronous>, transform_indices = @transform_3, window_bounds = array<i64: 51, 1>}, {transform_indices = @transform_4, window_bounds = array<i64: 1, 128>}]} {
    %c0 = arith.constant 0 : index
    %c0_0 = arith.constant 0 : index
    %0 = vector.load %arg2[%c0, %c0_0] : memref<101x10xf32, #tpu.memory_space<vmem>>, vector<101x10xf32>
    %c0_1 = arith.constant 0 : index
    %c0_2 = arith.constant 0 : index
    %1 = vector.load %arg1[%c0_1, %c0_2] : memref<10x128xf32, #tpu.memory_space<vmem>>, vector<10x128xf32>
    %cst = arith.constant dense<0.000000e+00> : vector<101x128xf32>
    %2 = tpu.matmul %0, %1, %cst {dimension_numbers = #tpu.dot_dimension_numbers<[1], [0], [0], [1], [0, 0, 1, 1], [], []>} : vector<101x10xf32>, vector<10x128xf32>, vector<101x128xf32> -> vector<101x128xf32>
    %cst_3 = arith.constant 0.000000e+00 : f32
    %3 = vector.broadcast %cst_3 : f32 to vector<101x128xf32>
    %4 = arith.maximumf %2, %3 : vector<101x128xf32>
    %c0_4 = arith.constant 0 : index
    %c0_5 = arith.constant 0 : index
    %5 = vector.load %arg3[%c0_4, %c0_5] : memref<51x101xf32, #tpu.memory_space<vmem>>, vector<51x101xf32>
    %cst_6 = arith.constant dense<0.000000e+00> : vector<51x128xf32>
    %6 = tpu.matmul %5, %4, %cst_6 {dimension_numbers = #tpu.dot_dimension_numbers<[1], [0], [0], [1], [0, 0, 1, 1], [], []>} : vector<51x101xf32>, vector<101x128xf32>, vector<51x128xf32> -> vector<51x128xf32>
    %cst_7 = arith.constant 0.000000e+00 : f32
    %7 = vector.broadcast %cst_7 : f32 to vector<51x128xf32>
    %8 = arith.maximumf %6, %7 : vector<51x128xf32>
    %c0_8 = arith.constant 0 : index
    %c0_9 = arith.constant 0 : index
    %9 = vector.load %arg4[%c0_8, %c0_9] : memref<51x1xf32, #tpu.memory_space<vmem>>, vector<51x1xf32>
    %10 = vector.broadcast %9 : vector<51x1xf32> to vector<51x128xf32>
    %11 = arith.mulf %8, %10 : vector<51x128xf32>
    %cst_10 = arith.constant dense<0.000000e+00> : vector<128xf32>
    %12 = vector.multi_reduction <add>, %11, %cst_10 [0] : vector<51x128xf32> to vector<128xf32>
    %13 = vector.shape_cast %12 : vector<128xf32> to vector<1x128xf32>
    %c0_11 = arith.constant 0 : index
    %c0_12 = arith.constant 0 : index
    %14 = vector.load %arg5[%c0_11, %c0_12] : memref<1x128xf32, #tpu.memory_space<vmem>>, vector<1x128xf32>
    tpu.vector_store %arg5[%c0_11, %c0_12], %13 {strides = array<i32>} : memref<1x128xf32, #tpu.memory_space<vmem>>, vector<1x128xf32>,
    return
  }
  func.func @transform_0(%arg0: i32) -> (i32, i32) {
    %c0_i32 = arith.constant 0 : i32
    %c0_i32_0 = arith.constant 0 : i32
    return %c0_i32, %arg0 : i32, i32
  }
  func.func @transform_1(%arg0: i32) -> (i32, i32) {
    %c0_i32 = arith.constant 0 : i32
    %c0_i32_0 = arith.constant 0 : i32
    %c0_i32_1 = arith.constant 0 : i32
    return %c0_i32, %c0_i32_0 : i32, i32
  }
  func.func @transform_2(%arg0: i32) -> (i32, i32) {
    %c0_i32 = arith.constant 0 : i32
    %c0_i32_0 = arith.constant 0 : i32
    %c0_i32_1 = arith.constant 0 : i32
    return %c0_i32, %c0_i32_0 : i32, i32
  }
  func.func @transform_3(%arg0: i32) -> (i32, i32) {
    %c0_i32 = arith.constant 0 : i32
    %c0_i32_0 = arith.constant 0 : i32
    %c0_i32_1 = arith.constant 0 : i32
    return %c0_i32, %c0_i32_0 : i32, i32
  }
  func.func @transform_4(%arg0: i32) -> (i32, i32) {
    %c0_i32 = arith.constant 0 : i32
    %c0_i32_0 = arith.constant 0 : i32
    return %c0_i32, %arg0 : i32, i32
  }
}

</mosaic_0001>

<llo_original>
// kernel: mlp_forward_pallas.1
$region0: #{mlp_forward_pallas.1}
  #allocation0 [shape = 'u32[]', space=smem, size = 0x4, offset = 0x4, fixed_abs, tag = 'smem constant byte address 0x4 - core index']
  #allocation1 [shape = 'u32[144,128]{1,0:T(1,128)}', space=vmem, size = 0x12000, scoped, tag = 'internal scratch']
  %s0 = inlined_call_operand.vmem [shape: f32[10,128], index: 0, kind: input, shape index: {}]
  %s1 = inlined_call_operand.vmem [shape: f32[101,10], index: 1, kind: input, shape index: {}]
  %s2 = inlined_call_operand.vmem [shape: f32[51,101], index: 2, kind: input, shape index: {}]
  %s3 = inlined_call_operand.vmem [shape: f32[51,1], index: 3, kind: input, shape index: {}]
  %s4 = inlined_call_operand.vmem [shape: f32[1,128], index: 4, kind: output, shape index: {}]
  %s5 = sld [smem:[#allocation0]]
  $region26: #{mlp_forward_pallas.1} parent=0
    _
  %s7 = ssub.s32 1, %s5
  %s8 = scalar_select 0, %s7, %s5
  // Predicated region
  $region2: #{mlp_forward_pallas.1} parent=0 // pred_check
    _
  $region3: #{mlp_forward_pallas.1} parent=0 // pred_check_branch
    %10 = sbr.rel (0) target = $region5
  $region4: #{mlp_forward_pallas.1} parent=0 // pred_region
    _
  $region5: #{mlp_forward_pallas.1} parent=0 // pred_fallthru
    _
  // Predicated region
  $region6: #{mlp_forward_pallas.1} parent=0 // pred_check
    _
  $region7: #{mlp_forward_pallas.1} parent=0 // pred_check_branch
    %12 = sbr.rel (0) target = $region9
  $region8: #{mlp_forward_pallas.1} parent=0 // pred_region
    _
  $region9: #{mlp_forward_pallas.1} parent=0 // pred_fallthru
    _
  // Predicated region
  $region10: #{mlp_forward_pallas.1} parent=0 // pred_check
    _
  $region11: #{mlp_forward_pallas.1} parent=0 // pred_check_branch
    %14 = sbr.rel (0) target = $region13
  $region12: #{mlp_forward_pallas.1} parent=0 // pred_region
    _
  $region13: #{mlp_forward_pallas.1} parent=0 // pred_fallthru
    _
  // Predicated region
  $region14: #{mlp_forward_pallas.1} parent=0 // pred_check
    _
  $region15: #{mlp_forward_pallas.1} parent=0 // pred_check_branch
    %16 = sbr.rel (0) target = $region17
  $region16: #{mlp_forward_pallas.1} parent=0 // pred_region
    _
  $region17: #{mlp_forward_pallas.1} parent=0 // pred_fallthru
    _
  %v17 = vld [vmem:[%s1] sm:$0xff]
  %v18 = vld [vmem:[%s1 + $0x8] sm:$0xff]
  %v19 = vld [vmem:[%s1 + $0x10] sm:$0xff]
  %v20 = vld [vmem:[%s1 + $0x18] sm:$0xff]
  %v21 = vld [vmem:[%s1 + $0x20] sm:$0xff]
  %v22 = vld [vmem:[%s1 + $0x28] sm:$0xff]
  %v23 = vld [vmem:[%s1 + $0x30] sm:$0xff]
  %v24 = vld [vmem:[%s1 + $0x38] sm:$0xff]
  %v25 = vld [vmem:[%s1 + $0x40] sm:$0xff]
  %v26 = vld [vmem:[%s1 + $0x48] sm:$0xff]
  %v27 = vld [vmem:[%s1 + $0x50] sm:$0xff]
  %v28 = vld [vmem:[%s1 + $0x58] sm:$0xff]
  %v29 = vld [vmem:[%s1 + $0x60] sm:$0x1f]
  %v30 = vld [vmem:[%s0] sm:$0xff]
  %v31 = vld [vmem:[%s0 + $0x8] sm:$0x3]
  %vm32 = vcmask 80896
  %v34 = vsel %vm32, %v17, 0
  %v37 = vsel %vm32, %v18, 0
  %v40 = vsel %vm32, %v19, 0
  %v43 = vsel %vm32, %v20, 0
  %v46 = vsel %vm32, %v21, 0
  %v49 = vsel %vm32, %v22, 0
  %v52 = vsel %vm32, %v23, 0
  %v55 = vsel %vm32, %v24, 0
  %v58 = vsel %vm32, %v25, 0
  %v61 = vsel %vm32, %v26, 0
  %v64 = vsel %vm32, %v27, 0
  %v67 = vsel %vm32, %v28, 0
  %v70 = vsel %vm32, %v29, 0
  %vm72 = vcmask 1041408
  %v74 = vsel %vm72, %v31, 0
  %76 = vmatprep.subr.mxu0 0.0
  %77 = vmatpush1.msra.mxu0 0.0
  %78 = vmatprep.subr.mxu0 0.0
  %79 = vmatpush1.msra.mxu0 0.0
  %80 = vmatprep.subr.mxu0 0.0
  %81 = vmatpush1.msra.mxu0 0.0
  %82 = vmatprep.subr.mxu0 0.0
  %83 = vmatpush1.msra.mxu0 0.0
  %84 = vmatprep.subr.mxu0 0.0
  %85 = vmatpush1.msra.mxu0 0.0
  %86 = vmatprep.subr.mxu0 0.0
  %87 = vmatpush1.msra.mxu0 0.0
  %88 = vmatprep.subr.mxu0 0.0
  %89 = vmatpush1.msra.mxu0 0.0
  %90 = vmatprep.subr.mxu0 0.0
  %91 = vmatpush1.msra.mxu0 0.0
  %92 = vmatprep.subr.mxu0 0.0
  %93 = vmatpush1.msra.mxu0 0.0
  %94 = vmatprep.subr.mxu0 0.0
  %95 = vmatpush1.msra.mxu0 0.0
  %96 = vmatprep.subr.mxu0 0.0
  %97 = vmatpush1.msra.mxu0 0.0
  %98 = vmatprep.subr.mxu0 0.0
  %99 = vmatpush1.msra.mxu0 0.0
  %100 = vmatprep.subr.mxu0 0.0
  %101 = vmatpush1.msra.mxu0 0.0
  %102 = vmatprep.subr.mxu0 0.0
  %103 = vmatpush1.msra.mxu0 0.0
  %104 = vmatprep.subr.mxu0 0.0
  %105 = vmatpush1.msra.mxu0 %v74
  %106 = vmatprep.subr.mxu0 0.0
  %107 = vmatpush1.msra.mxu0 %v30
  %108 = vmatprep.subr.mxu0 0.0
  %109 = vmatpush2.msra.mxu0 0.0
  %110 = vmatprep.subr.mxu0 0.0
  %111 = vmatpush2.msra.mxu0 0.0
  %112 = vmatprep.subr.mxu0 0.0
  %113 = vmatpush2.msra.mxu0 0.0
  %114 = vmatprep.subr.mxu0 0.0
  %115 = vmatpush2.msra.mxu0 0.0
  %116 = vmatprep.subr.mxu0 0.0
  %117 = vmatpush2.msra.mxu0 0.0
  %118 = vmatprep.subr.mxu0 0.0
  %119 = vmatpush2.msra.mxu0 0.0
  %120 = vmatprep.subr.mxu0 0.0
  %121 = vmatpush2.msra.mxu0 0.0
  %122 = vmatprep.subr.mxu0 0.0
  %123 = vmatpush2.msra.mxu0 0.0
  %124 = vmatprep.subr.mxu0 0.0
  %125 = vmatpush2.msra.mxu0 0.0
  %126 = vmatprep.subr.mxu0 0.0
  %127 = vmatpush2.msra.mxu0 0.0
  %128 = vmatprep.subr.mxu0 0.0
  %129 = vmatpush2.msra.mxu0 0.0
  %130 = vmatprep.subr.mxu0 0.0
  %131 = vmatpush2.msra.mxu0 0.0
  %132 = vmatprep.subr.mxu0 0.0
  %133 = vmatpush2.msra.mxu0 0.0
  %134 = vmatprep.subr.mxu0 0.0
  %135 = vmatpush2.msra.mxu0 0.0
  %136 = vmatprep.subr.mxu0 0.0
  %137 = vmatpush2.msra.mxu0 0.0
  %138 = vmatprep.subr.mxu0 0.0
  %139 = vmatpush2.msra.mxu0 0.0
  %140 = vmatprep.mubr.f32.mxu0 0.0
  %141 = vmatmul.mubr.f32.gmra.mxu0 %v34
  %v142 = vpop.f32.mrf.mxu0
  %v143 = vadd.f32 0.0, %v142
  %v144 = vpop.f32.mrf.mxu0
  %145 = vmatprep.mubr.f32.mxu0 0.0
  %146 = vmatmul.mubr.f32.gmra.mxu0 %v37
  %v147 = vpop.f32.mrf.mxu0
  %v148 = vadd.f32 0.0, %v147
  %v149 = vpop.f32.mrf.mxu0
  %150 = vmatprep.mubr.f32.mxu0 0.0
  %151 = vmatmul.mubr.f32.gmra.mxu0 %v40
  %v152 = vpop.f32.mrf.mxu0
  %v153 = vadd.f32 0.0, %v152
  %v154 = vpop.f32.mrf.mxu0
  %155 = vmatprep.mubr.f32.mxu0 0.0
  %156 = vmatmul.mubr.f32.gmra.mxu0 %v43
  %v157 = vpop.f32.mrf.mxu0
  %v158 = vadd.f32 0.0, %v157
  %v159 = vpop.f32.mrf.mxu0
  %160 = vmatprep.mubr.f32.mxu0 0.0
  %161 = vmatmul.mubr.f32.gmra.mxu0 %v46
  %v162 = vpop.f32.mrf.mxu0
  %v163 = vadd.f32 0.0, %v162
  %v164 = vpop.f32.mrf.mxu0
  %165 = vmatprep.mubr.f32.mxu0 0.0
  %166 = vmatmul.mubr.f32.gmra.mxu0 %v49
  %v167 = vpop.f32.mrf.mxu0
  %v168 = vadd.f32 0.0, %v167
  %v169 = vpop.f32.mrf.mxu0
  %170 = vmatprep.mubr.f32.mxu0 0.0
  %171 = vmatmul.mubr.f32.gmra.mxu0 %v52
  %v172 = vpop.f32.mrf.mxu0
  %v173 = vadd.f32 0.0, %v172
  %v174 = vpop.f32.mrf.mxu0
  %175 = vmatprep.mubr.f32.mxu0 0.0
  %176 = vmatmul.mubr.f32.gmra.mxu0 %v55
  %v177 = vpop.f32.mrf.mxu0
  %v178 = vadd.f32 0.0, %v177
  %v179 = vpop.f32.mrf.mxu0
  %180 = vmatprep.mubr.f32.mxu0 0.0
  %181 = vmatmul.mubr.f32.gmra.mxu0 %v58
  %v182 = vpop.f32.mrf.mxu0
  %v183 = vadd.f32 0.0, %v182
  %v184 = vpop.f32.mrf.mxu0
  %185 = vmatprep.mubr.f32.mxu0 0.0
  %186 = vmatmul.mubr.f32.gmra.mxu0 %v61
  %v187 = vpop.f32.mrf.mxu0
  %v188 = vadd.f32 0.0, %v187
  %v189 = vpop.f32.mrf.mxu0
  %190 = vmatprep.mubr.f32.mxu0 0.0
  %191 = vmatmul.mubr.f32.gmra.mxu0 %v64
  %v192 = vpop.f32.mrf.mxu0
  %v193 = vadd.f32 0.0, %v192
  %v194 = vpop.f32.mrf.mxu0
  %195 = vmatprep.mubr.f32.mxu0 0.0
  %196 = vmatmul.mubr.f32.gmra.mxu0 %v67
  %v197 = vpop.f32.mrf.mxu0
  %v198 = vadd.f32 0.0, %v197
  %v199 = vpop.f32.mrf.mxu0
  %200 = vmatprep.mubr.f32.mxu0 0.0
  %201 = vmatmul.mubr.f32.gmra.mxu0 %v70
  %v202 = vpop.f32.mrf.mxu0
  %v203 = vadd.f32 0.0, %v202
  %v204 = vpop.f32.mrf.mxu0
  %205 = vdwg.mxu0
  %v206 = vmax.f32 %v143, 0.0
  %v207 = vmax.f32 %v148, 0.0
  %v208 = vmax.f32 %v153, 0.0
  %v209 = vmax.f32 %v158, 0.0
  %v210 = vmax.f32 %v163, 0.0
  %v211 = vmax.f32 %v168, 0.0
  %v212 = vmax.f32 %v173, 0.0
  %v213 = vmax.f32 %v178, 0.0
  %v214 = vmax.f32 %v183, 0.0
  %v215 = vmax.f32 %v188, 0.0
  %v216 = vmax.f32 %v193, 0.0
  %v217 = vmax.f32 %v198, 0.0
  %v218 = vmax.f32 %v203, 0.0
  %v219 = vld [vmem:[%s2] sm:$0xff]
  %v220 = vld [vmem:[%s2 + $0x8] sm:$0xff]
  %v221 = vld [vmem:[%s2 + $0x10] sm:$0xff]
  %v222 = vld [vmem:[%s2 + $0x18] sm:$0xff]
  %v223 = vld [vmem:[%s2 + $0x20] sm:$0xff]
  %v224 = vld [vmem:[%s2 + $0x28] sm:$0xff]
  %v225 = vld [vmem:[%s2 + $0x30] sm:$0x7]
  %vm226 = vcmask 826368
  %v228 = vsel %vm226, %v219, 0
  %v231 = vsel %vm226, %v220, 0
  %v234 = vsel %vm226, %v221, 0
  %v237 = vsel %vm226, %v222, 0
  %v240 = vsel %vm226, %v223, 0
  %v243 = vsel %vm226, %v224, 0
  %v246 = vsel %vm226, %v225, 0
  %vm248 = vcmask 1044480
  %v250 = vsel %vm248, %v218, 0
  %252 = vmatprep.subr.mxu0 0.0
  %253 = vmatpush1.msra.mxu0 0.0
  %254 = vmatprep.subr.mxu0 0.0
  %255 = vmatpush1.msra.mxu0 0.0
  %256 = vmatprep.subr.mxu0 0.0
  %257 = vmatpush1.msra.mxu0 0.0
  %258 = vmatprep.subr.mxu0 0.0
  %259 = vmatpush1.msra.mxu0 %v250
  %260 = vmatprep.subr.mxu0 0.0
  %261 = vmatpush1.msra.mxu0 %v217
  %262 = vmatprep.subr.mxu0 0.0
  %263 = vmatpush1.msra.mxu0 %v216
  %264 = vmatprep.subr.mxu0 0.0
  %265 = vmatpush1.msra.mxu0 %v215
  %266 = vmatprep.subr.mxu0 0.0
  %267 = vmatpush1.msra.mxu0 %v214
  %268 = vmatprep.subr.mxu0 0.0
  %269 = vmatpush1.msra.mxu0 %v213
  %270 = vmatprep.subr.mxu0 0.0
  %271 = vmatpush1.msra.mxu0 %v212
  %272 = vmatprep.subr.mxu0 0.0
  %273 = vmatpush1.msra.mxu0 %v211
  %274 = vmatprep.subr.mxu0 0.0
  %275 = vmatpush1.msra.mxu0 %v210
  %276 = vmatprep.subr.mxu0 0.0
  %277 = vmatpush1.msra.mxu0 %v209
  %278 = vmatprep.subr.mxu0 0.0
  %279 = vmatpush1.msra.mxu0 %v208
  %280 = vmatprep.subr.mxu0 0.0
  %281 = vmatpush1.msra.mxu0 %v207
  %282 = vmatprep.subr.mxu0 0.0
  %283 = vmatpush1.msra.mxu0 %v206
  %284 = vmatprep.subr.mxu0 0.0
  %285 = vmatpush2.msra.mxu0 0.0
  %286 = vmatprep.subr.mxu0 0.0
  %287 = vmatpush2.msra.mxu0 0.0
  %288 = vmatprep.subr.mxu0 0.0
  %289 = vmatpush2.msra.mxu0 0.0
  %290 = vmatprep.subr.mxu0 0.0
  %291 = vmatpush2.msra.mxu0 0.0
  %292 = vmatprep.subr.mxu0 0.0
  %293 = vmatpush2.msra.mxu0 0.0
  %294 = vmatprep.subr.mxu0 0.0
  %295 = vmatpush2.msra.mxu0 0.0
  %296 = vmatprep.subr.mxu0 0.0
  %297 = vmatpush2.msra.mxu0 0.0
  %298 = vmatprep.subr.mxu0 0.0
  %299 = vmatpush2.msra.mxu0 0.0
  %300 = vmatprep.subr.mxu0 0.0
  %301 = vmatpush2.msra.mxu0 0.0
  %302 = vmatprep.subr.mxu0 0.0
  %303 = vmatpush2.msra.mxu0 0.0
  %304 = vmatprep.subr.mxu0 0.0
  %305 = vmatpush2.msra.mxu0 0.0
  %306 = vmatprep.subr.mxu0 0.0
  %307 = vmatpush2.msra.mxu0 0.0
  %308 = vmatprep.subr.mxu0 0.0
  %309 = vmatpush2.msra.mxu0 0.0
  %310 = vmatprep.subr.mxu0 0.0
  %311 = vmatpush2.msra.mxu0 0.0
  %312 = vmatprep.subr.mxu0 0.0
  %313 = vmatpush2.msra.mxu0 0.0
  %314 = vmatprep.subr.mxu0 0.0
  %315 = vmatpush2.msra.mxu0 0.0
  %316 = vmatprep.mubr.f32.mxu0 0.0
  %317 = vmatmul.mubr.f32.gmra.mxu0 %v228
  %v318 = vpop.f32.mrf.mxu0
  %v319 = vadd.f32 0.0, %v318
  %v320 = vpop.f32.mrf.mxu0
  %321 = vmatprep.mubr.f32.mxu0 0.0
  %322 = vmatmul.mubr.f32.gmra.mxu0 %v231
  %v323 = vpop.f32.mrf.mxu0
  %v324 = vadd.f32 0.0, %v323
  %v325 = vpop.f32.mrf.mxu0
  %326 = vmatprep.mubr.f32.mxu0 0.0
  %327 = vmatmul.mubr.f32.gmra.mxu0 %v234
  %v328 = vpop.f32.mrf.mxu0
  %v329 = vadd.f32 0.0, %v328
  %v330 = vpop.f32.mrf.mxu0
  %331 = vmatprep.mubr.f32.mxu0 0.0
  %332 = vmatmul.mubr.f32.gmra.mxu0 %v237
  %v333 = vpop.f32.mrf.mxu0
  %v334 = vadd.f32 0.0, %v333
  %v335 = vpop.f32.mrf.mxu0
  %336 = vmatprep.mubr.f32.mxu0 0.0
  %337 = vmatmul.mubr.f32.gmra.mxu0 %v240
  %v338 = vpop.f32.mrf.mxu0
  %v339 = vadd.f32 0.0, %v338
  %v340 = vpop.f32.mrf.mxu0
  %341 = vmatprep.mubr.f32.mxu0 0.0
  %342 = vmatmul.mubr.f32.gmra.mxu0 %v243
  %v343 = vpop.f32.mrf.mxu0
  %v344 = vadd.f32 0.0, %v343
  %v345 = vpop.f32.mrf.mxu0
  %346 = vmatprep.mubr.f32.mxu0 0.0
  %347 = vmatmul.mubr.f32.gmra.mxu0 %v246
  %v348 = vpop.f32.mrf.mxu0
  %v349 = vadd.f32 0.0, %v348
  %v350 = vpop.f32.mrf.mxu0
  %351 = vdwg.mxu0
  %v352 = vmax.f32 %v319, 0.0
  %v353 = vmax.f32 %v324, 0.0
  %v354 = vmax.f32 %v329, 0.0
  %v355 = vmax.f32 %v334, 0.0
  %v356 = vmax.f32 %v339, 0.0
  %v357 = vmax.f32 %v344, 0.0
  %v358 = vmax.f32 %v349, 0.0
  %v359 = vld [vmem:[%s3] sm:$0xff]
  %v360 = vld [vmem:[%s3 + $0x8] sm:$0xff]
  %v361 = vld [vmem:[%s3 + $0x10] sm:$0xff]
  %v362 = vld [vmem:[%s3 + $0x18] sm:$0xff]
  %v363 = vld [vmem:[%s3 + $0x20] sm:$0xff]
  %v364 = vld [vmem:[%s3 + $0x28] sm:$0xff]
  %v365 = vld [vmem:[%s3 + $0x30] sm:$0x7]
  %367 = vset.pattern.permute.xlu0 0
  %368 = vperm.xlu0 %367, %v359
  %v369 = vpop.permute.xlu0 %368
  %372 = vset.pattern.permute.xlu0 0
  %373 = vperm.xlu0 %372, %v360
  %v374 = vpop.permute.xlu0 %373
  %377 = vset.pattern.permute.xlu0 0
  %378 = vperm.xlu0 %377, %v361
  %v379 = vpop.permute.xlu0 %378
  %382 = vset.pattern.permute.xlu0 0
  %383 = vperm.xlu0 %382, %v362
  %v384 = vpop.permute.xlu0 %383
  %387 = vset.pattern.permute.xlu0 0
  %388 = vperm.xlu0 %387, %v363
  %v389 = vpop.permute.xlu0 %388
  %392 = vset.pattern.permute.xlu0 0
  %393 = vperm.xlu0 %392, %v364
  %v394 = vpop.permute.xlu0 %393
  %397 = vset.pattern.permute.xlu0 0
  %398 = vperm.xlu0 %397, %v365
  %v399 = vpop.permute.xlu0 %398
  %v401 = vmul.f32 %v352, %v369
  %v402 = vmul.f32 %v353, %v374
  %v403 = vmul.f32 %v354, %v379
  %v404 = vmul.f32 %v355, %v384
  %v405 = vmul.f32 %v356, %v389
  %v406 = vmul.f32 %v357, %v394
  %v407 = vmul.f32 %v358, %v399
  %v408 = vadd.f32 %v401, %v402
  %v409 = vadd.f32 %v408, %v403
  %v410 = vadd.f32 %v409, %v404
  %v411 = vadd.f32 %v410, %v405
  %v412 = vadd.f32 %v411, %v406
  %vm413 = vcmask 1042432
  %v414 = vsel %vm413, %v407, 0.0
  %v415 = vadd.f32 %v412, %v414
  %v416 = vrot.slane %v415, 4
  %v417 = vadd.f32 %v415, %v416
  %v418 = vrot.slane %v417, 2
  %v419 = vadd.f32 %v417, %v418
  %v420 = vrot.slane %v419, 1
  %v421 = vadd.f32 %v419, %v420
  %422 = vst [vmem:[%s4] sm:$0x1] %v421
  // Predicated region
  $region18: #{mlp_forward_pallas.1} parent=0 // pred_check
    _
  $region19: #{mlp_forward_pallas.1} parent=0 // pred_check_branch
    %424 = sbr.rel (0) target = $region21
  $region20: #{mlp_forward_pallas.1} parent=0 // pred_region
    _
  $region21: #{mlp_forward_pallas.1} parent=0 // pred_fallthru
    _
  // Predicated region
  $region22: #{mlp_forward_pallas.1} parent=0 // pred_check
    _
  $region23: #{mlp_forward_pallas.1} parent=0 // pred_check_branch
    %426 = sbr.rel (0) target = $region25
  $region24: #{mlp_forward_pallas.1} parent=0 // pred_region
    _
  $region25: #{mlp_forward_pallas.1} parent=0 // pred_fallthru
    _

</llo_original>
